<compile_context>
chip_gen: v6e
topology: v6e:2x2x1
jax: 0.10.0
libtpu: 0.0.40
codegen_flags: <defaults>
</compile_context>

<pallas_src>
import jax
import jax.numpy as jnp
from jax.experimental import pallas as pl
from jax.experimental.pallas import tpu as pltpu


def _relu_kernel(x_ref, o_ref):
    # ReLU: max(x, 0). Single VALU op per vreg; kernel is HBM-bandwidth bound.
    o_ref[...] = jnp.maximum(x_ref[...], 0)


def relu(x: jax.Array) -> jax.Array:
    orig_shape = x.shape
    orig_dtype = x.dtype
    n = x.size

    if n == 0:
        return x

    # ---- choose a lane-dense 2D layout: (rows, lane) ----
    # Widest lane extent (multiple of 128) that divides n -> big unmasked
    # vector stores and short grids. Pad only when n isn't a multiple of 128.
    lane = None
    for cand in (1024, 512, 256, 128):
        if n % cand == 0:
            lane = cand
            break

    flat = jnp.ravel(x)
    if lane is None:
        lane = 128
        n_pad = pl.cdiv(n, lane) * lane
        flat = jnp.pad(flat, (0, n_pad - n))
    else:
        n_pad = n  # no padding copy emitted

    rows = n_pad // lane
    x2d = flat.reshape(rows, lane)

    # ---- block size: ~2 MiB per buffer ----
    # 2 MiB blocks x (in + out) x double-buffering = 8 MiB of VMEM, which fits
    # comfortably inside the default scoped VMEM budget on v5e (16 MiB) and
    # v6e/v7x (32 MiB) while being large enough (~1-4 MiB class) to reach
    # ~85%+ of the HBM roofline.
    itemsize = jnp.dtype(orig_dtype).itemsize
    target_block_bytes = 2 * 1024 * 1024
    tile_rows = min(rows, max(8, target_block_bytes // (lane * itemsize)))
    if tile_rows != rows:
        # Block rows must be a multiple of 8 (sublane) unless equal to the
        # full array extent; Pallas masks the ragged edge block automatically.
        tile_rows = max(8, (tile_rows // 8) * 8)

    grid = (pl.cdiv(rows, tile_rows),)

    out2d = pl.pallas_call(
        _relu_kernel,
        out_shape=jax.ShapeDtypeStruct((rows, lane), orig_dtype),
        grid=grid,
        in_specs=[pl.BlockSpec((tile_rows, lane), lambda i: (i, 0))],
        out_specs=pl.BlockSpec((tile_rows, lane), lambda i: (i, 0)),
        compiler_params=pltpu.CompilerParams(
            # Lets the grid shard across both TensorCores on v7x; measured
            # neutral on single-TC v5e/v6e.
            dimension_semantics=("parallel",),
        ),
    )(x2d)

    out_flat = out2d.reshape(-1)
    if n_pad != n:
        out_flat = out_flat[:n]
    return out_flat.reshape(orig_shape)


if __name__ == "__main__":
    key = jax.random.PRNGKey(0)
    # NCHW, conv-style input consistent with the PyTorch module.
    x = jax.random.normal(key, (2, 4, 16, 16), dtype=jnp.float32)

    y = relu(x)
    y = jax.block_until_ready(y)

    # Reference check against plain JAX ReLU.
    y_ref = jnp.maximum(x, 0)
    assert y.shape == x.shape and y.dtype == x.dtype
    assert jnp.allclose(y, y_ref, atol=1e-6, rtol=1e-6)

    print("KERNEL_OK")
</pallas_src>

<mosaic_0001>
module attributes {stable_mosaic.version = 11 : i64} {
  func.func @_relu_kernel(%arg0: i32, %arg1: memref<2x1024xf32, #tpu.memory_space<vmem>>, %arg2: memref<2x1024xf32, #tpu.memory_space<vmem>>) attributes {dimension_semantics = [#tpu.dimension_semantics<parallel>], iteration_bounds = array<i64: 1>, scalar_prefetch = 0 : i64, scratch_operands = 0 : i64, tpu.core_type = #tpu.core_type<tc>, window_params = [{transform_indices = @transform_0, window_bounds = array<i64: 2, 1024>}, {transform_indices = @transform_1, window_bounds = array<i64: 2, 1024>}]} {
    %c0 = arith.constant 0 : index
    %c0_0 = arith.constant 0 : index
    %0 = vector.load %arg1[%c0, %c0_0] : memref<2x1024xf32, #tpu.memory_space<vmem>>, vector<2x1024xf32>
    %cst = arith.constant 0.000000e+00 : f32
    %1 = vector.broadcast %cst : f32 to vector<2x1024xf32>
    %2 = arith.maximumf %0, %1 : vector<2x1024xf32>
    %c0_1 = arith.constant 0 : index
    %c0_2 = arith.constant 0 : index
    %3 = vector.load %arg2[%c0_1, %c0_2] : memref<2x1024xf32, #tpu.memory_space<vmem>>, vector<2x1024xf32>
    tpu.vector_store %arg2[%c0_1, %c0_2], %2 {strides = array<i32>} : memref<2x1024xf32, #tpu.memory_space<vmem>>, vector<2x1024xf32>,
    return
  }
  func.func @transform_0(%arg0: i32) -> (i32, i32) {
    %c0_i32 = arith.constant 0 : i32
    %c0_i32_0 = arith.constant 0 : i32
    return %arg0, %c0_i32 : i32, i32
  }
  func.func @transform_1(%arg0: i32) -> (i32, i32) {
    %c0_i32 = arith.constant 0 : i32
    %c0_i32_0 = arith.constant 0 : i32
    return %arg0, %c0_i32 : i32, i32
  }
}

</mosaic_0001>

<llo_original>
// kernel: tpu_custom_call.1
$region0: #{tpu_custom_call.1}
  #allocation0 [shape = 'u32[]', space=smem, size = 0x4, offset = 0x4, fixed_abs, tag = 'smem constant byte address 0x4 - core index']
  #allocation1 [shape = 'u32[144,128]{1,0:T(1,128)}', space=vmem, size = 0x12000, scoped, tag = 'internal scratch']
  %s0 = inlined_call_operand.hbm [shape: f32[2,1024], index: 0, kind: input, shape index: {}]
  %s1 = inlined_call_operand.hbm [shape: f32[2,1024], index: 1, kind: output, shape index: {}]
  %s2 = sld [smem:[#allocation0]]
  $region18: #{tpu_custom_call.1} parent=0
    _
  %s4 = ssub.s32 1, %s2
  %s5 = scalar_select 0, %s4, %s2
  $region1: #{tpu_custom_call.1} parent=0
    #allocation2 [shape = 'u8[8192]{0}', space=vmem, size = 0x2000, scoped, tag = 'input window, operand 0, single buffered']
    #allocation3 [shape = 's32[1]{0}', space=sflag, size = 0x4, scoped, tag = 'scoped memory for tpu_custom_call.1']
    #allocation4 [shape = 's32[1]{0}', space=sflag, size = 0x4, scoped, tag = 'scoped memory for tpu_custom_call.1']
    #allocation5 [shape = 'u8[8192]{0}', space=vmem, size = 0x2000, scoped, tag = 'output window, operand 0, single buffered']
    %6 = vsyncpa [#allocation3], 0
    %7 = vsyncpa [#allocation4], 0
    // Predicated region
    $region2: #{tpu_custom_call.1} parent=1 // pred_check
      _
    $region3: #{tpu_custom_call.1} parent=1 // pred_check_branch
      %9 = sbr.rel (0) target = $region5
    $region4: #{tpu_custom_call.1} parent=1 // pred_region
      %s11 = ssub.s32 256, 256
      %12 = vsyncadd [#allocation3], %s11
      %s14 = sshll.u32 [#allocation2], 4
      %s15 = int_to_ptr.vmem [resolvable:$true] %s14
      %17 = dma.hbm_to_vmem [thread:$0]  %s0, 256, %s15, [#allocation3]
    $region5: #{tpu_custom_call.1} parent=1 // pred_fallthru
      _
    // Predicated region
    $region6: #{tpu_custom_call.1} parent=1 // pred_check
      _
    $region7: #{tpu_custom_call.1} parent=1 // pred_check_branch
      %19 = sbr.rel (0) target = $region9
    $region8: #{tpu_custom_call.1} parent=1 // pred_region
      %20 = dma.done [#allocation3], 256
    $region9: #{tpu_custom_call.1} parent=1 // pred_fallthru
      _
    %v21 = vld [vmem:[#allocation2] sm:$0xff]
    %v22 = vld [vmem:[#allocation2 + $0x8] sm:$0xff]
    %v23 = vmax.f32 %v21, 0.0
    %v24 = vmax.f32 %v22, 0.0
    %25 = vst [vmem:[#allocation5] sm:$0xff] %v23
    %26 = vst [vmem:[#allocation5 + $0x8] sm:$0xff] %v24
    // Predicated region
    $region10: #{tpu_custom_call.1} parent=1 // pred_check
      _
    $region11: #{tpu_custom_call.1} parent=1 // pred_check_branch
      %28 = sbr.rel (0) target = $region13
    $region12: #{tpu_custom_call.1} parent=1 // pred_region
      %s30 = ssub.s32 256, 256
      %31 = vsyncadd [#allocation4], %s30
      %s33 = sshll.u32 [#allocation5], 4
      %s34 = int_to_ptr.vmem [resolvable:$true] %s33
      %36 = dma.vmem_to_hbm [thread:$0]  %s34, 256, %s1, [#allocation4]
    $region13: #{tpu_custom_call.1} parent=1 // pred_fallthru
      _
    // Predicated region
    $region14: #{tpu_custom_call.1} parent=1 // pred_check
      _
    $region15: #{tpu_custom_call.1} parent=1 // pred_check_branch
      %38 = sbr.rel (0) target = $region17
    $region16: #{tpu_custom_call.1} parent=1 // pred_region
      %39 = dma.done [#allocation4], 256
    $region17: #{tpu_custom_call.1} parent=1 // pred_fallthru
      _
    %40 = vsyncpa [#allocation3], 1
    %41 = vsyncpa [#allocation4], 1

</llo_original>
